<compile_context>
chip_gen: v6e
topology: v6e:2x2x1
jax: 0.10.0
libtpu: 0.0.40
codegen_flags: <defaults>
</compile_context>

<pallas_src>
import jax
import jax.numpy as jnp
from jax.experimental import pallas as pl
from jax.experimental.pallas import tpu as pltpu

EMB = 64       # image_embedding_size == semi_memory_size == LSTM hidden
N_ACT = 3      # simplified MiniGrid action space
LAYER_W = 64   # actor / critic hidden width

# row offsets of each weight inside the packed (848, 256) bf16 weight slab
_R_C1, _R_C2, _R_C3, _R_L, _R_H1, _R_H2, _R_H3 = 0, 128, 272, 400, 528, 592, 720
W_ROWS = 848


# ----------------------------------------------------------------------------
# Fused forward kernel (one grid step = one batch block)
# ----------------------------------------------------------------------------
def fused_forward_kernel(p_ref, mem_ref, w_ref, b_ref, newmem_ref, head_ref):
    f32, bf16 = jnp.float32, jnp.bfloat16
    Bb = mem_ref.shape[0]

    def mxu(a, w):  # bf16 MXU operands, f32 accumulation
        return jnp.dot(a.astype(bf16), w, preferred_element_type=f32)

    # conv1 (2x2, 3->16) + ReLU + MaxPool(2x2): one (4B,128)@(128,144) block-diag matmul,
    # then max over the 4 pool-offset row slabs -> lane-dense (p,q,c) pooled map.
    y1 = mxu(p_ref[...], w_ref[_R_C1:_R_C1 + 128, 0:144])                     # (4Bb, 144)
    m = jnp.maximum(jnp.maximum(y1[0:Bb], y1[Bb:2 * Bb]),
                    jnp.maximum(y1[2 * Bb:3 * Bb], y1[3 * Bb:4 * Bb]))
    pool = jnp.maximum(m + b_ref[0:1, 0:144], 0.0)                            # (Bb, 144)

    # conv2 (2x2, 16->32) + ReLU: one (B,144)@(144,128) block-sparse matmul -> lane-dense (u,v,c).
    y2 = jnp.maximum(mxu(pool, w_ref[_R_C2:_R_C2 + 144, 0:128]) + b_ref[1:2, 0:128], 0.0)

    # conv3 (2x2, 32->64) + ReLU: one (B,128)@(128,64) matmul -> image embedding x (B,64).
    x = jnp.maximum(mxu(y2, w_ref[_R_C3:_R_C3 + 128, 0:64]) + b_ref[2:3, 0:64], 0.0)

    # LSTMCell(64->64): one (B,128)@(128,256) matmul on [x|h0] against stacked [Wx;Wh], gates [i|f|g|o].
    h0 = mem_ref[:, 0:EMB]
    c0 = mem_ref[:, EMB:2 * EMB]
    gates = mxu(jnp.concatenate([x, h0], axis=1),
                w_ref[_R_L:_R_L + 128, 0:256]) + b_ref[3:4, 0:256]            # (Bb, 256)
    i_g = jax.nn.sigmoid(gates[:, 0:EMB])
    f_g = jax.nn.sigmoid(gates[:, EMB:2 * EMB])
    g_g = jnp.tanh(gates[:, 2 * EMB:3 * EMB])
    o_g = jax.nn.sigmoid(gates[:, 3 * EMB:4 * EMB])
    c_new = f_g * c0 + i_g * g_g
    h_new = o_g * jnp.tanh(c_new)
    newmem_ref[:, 0:EMB] = h_new
    newmem_ref[:, EMB:2 * EMB] = c_new

    # actor & critic heads fused (concatenated / block-diagonal weights), all 128-lane-dense.
    t1 = jnp.tanh(mxu(h_new, w_ref[_R_H1:_R_H1 + 64, 0:128]) + b_ref[4:5, 0:128])
    t2 = jnp.tanh(mxu(t1, w_ref[_R_H2:_R_H2 + 128, 0:128]) + b_ref[5:6, 0:128])
    out = mxu(t2, w_ref[_R_H3:_R_H3 + 128, 0:128]) + b_ref[6:7, 0:128]        # [logits(3)|value(1)|0..]
    logits = out[:, 0:N_ACT]
    mx = jnp.max(logits, axis=1, keepdims=True)
    lse = mx + jnp.log(jnp.sum(jnp.exp(logits - mx), axis=1, keepdims=True))
    col = jax.lax.broadcasted_iota(jnp.int32, (Bb, 128), 1)
    head_ref[...] = jnp.where(col < N_ACT, out - lse, out)   # cols 0..2 log-probs, col 3 value


# ----------------------------------------------------------------------------
# Parameters (same layer shapes / init style as the PyTorch module), packed into two slabs
# ----------------------------------------------------------------------------
def init_params(key):
    ks = jax.random.split(key, 16)
    it = iter(ks)

    def u(k, shape, bound):
        return jax.random.uniform(k, shape, jnp.float32, -bound, bound)

    def row_norm_linear(k, fan_in, fan_out):
        # ModdedRLStarter.init_params: normal(0,1), rows scaled to unit L2 norm, zero bias.
        w = jax.random.normal(k, (fan_out, fan_in), jnp.float32)
        w = w / jnp.sqrt(jnp.sum(w * w, axis=1, keepdims=True))
        return w.T                                        # stored (fan_in, fan_out) for x @ w

    raw = {}
    bd = 1.0 / (3 * 2 * 2) ** 0.5                         # conv1 (Conv2d default init)
    raw['w1'] = u(next(it), (12, 16), bd)                 # [(kh*2+kw)*3+cin, oc]
    raw['b1'] = u(next(it), (16,), bd)
    bd = 1.0 / (16 * 2 * 2) ** 0.5                        # conv2
    raw['w2'] = u(next(it), (64, 32), bd)                 # [(kh*2+kw)*16+cin, oc]
    raw['b2'] = u(next(it), (32,), bd)
    bd = 1.0 / (32 * 2 * 2) ** 0.5                        # conv3
    raw['w3'] = u(next(it), (128, 64), bd)                # [(u*2+v)*32+cin, oc]
    raw['b3'] = u(next(it), (64,), bd)
    bd = 1.0 / EMB ** 0.5                                 # LSTMCell default init, gate order i|f|g|o
    raw['wlx'] = u(next(it), (EMB, 4 * EMB), bd)
    raw['wlh'] = u(next(it), (EMB, 4 * EMB), bd)
    raw['bl'] = u(next(it), (4 * EMB,), bd) + u(next(it), (4 * EMB,), bd)     # b_ih + b_hh
    raw['aw1'] = row_norm_linear(next(it), EMB, LAYER_W)
    raw['cw1'] = row_norm_linear(next(it), EMB, LAYER_W)
    raw['aw2'] = row_norm_linear(next(it), LAYER_W, LAYER_W)
    raw['cw2'] = row_norm_linear(next(it), LAYER_W, LAYER_W)
    raw['aw3'] = row_norm_linear(next(it), LAYER_W, N_ACT)
    raw['cw3'] = row_norm_linear(next(it), LAYER_W, 1)

    # ---- conv1: block-diagonal (128,144): 9 copies of the (12,16) kernel, one per pooled position
    w1_big = jnp.zeros((128, 144), jnp.float32)
    for pq in range(9):
        w1_big = w1_big.at[pq * 12:(pq + 1) * 12, pq * 16:(pq + 1) * 16].set(raw['w1'])

    # ---- conv2: block-sparse (144,128) im2col weight -> lane-dense (u,v,oc) output in one dot
    w2_big = jnp.zeros((144, 128), jnp.float32)
    for uu in range(2):
        for vv in range(2):
            for kh in range(2):
                for kw in range(2):
                    r = ((uu + kh) * 3 + (vv + kw)) * 16
                    c = (uu * 2 + vv) * 32
                    s = (kh * 2 + kw) * 16
                    w2_big = w2_big.at[r:r + 16, c:c + 32].set(raw['w2'][s:s + 16, :])

    wl = jnp.concatenate([raw['wlx'], raw['wlh']], axis=0)                    # (128,256) stacked LSTM
    z64 = jnp.zeros((LAYER_W, LAYER_W), jnp.float32)
    wh1 = jnp.concatenate([raw['aw1'], raw['cw1']], axis=1)                   # (64,128)
    wh2 = jnp.block([[raw['aw2'], z64], [z64, raw['cw2']]])                   # (128,128)
    wh3 = jnp.zeros((128, 128), jnp.float32)                                  # [logits(3)|value(1)|0..]
    wh3 = wh3.at[:LAYER_W, 0:N_ACT].set(raw['aw3']).at[LAYER_W:, N_ACT:N_ACT + 1].set(raw['cw3'])

    def lanes256(w):
        return jnp.pad(w, ((0, 0), (0, 256 - w.shape[1])))

    w_slab = jnp.concatenate(
        [lanes256(w) for w in (w1_big, w2_big, raw['w3'], wl, wh1, wh2, wh3)],
        axis=0).astype(jnp.bfloat16)                                          # (848, 256)

    b_slab = jnp.zeros((8, 256), jnp.float32)
    b_slab = b_slab.at[0, 0:144].set(jnp.tile(raw['b1'], 9))
    b_slab = b_slab.at[1, 0:128].set(jnp.tile(raw['b2'], 4))
    b_slab = b_slab.at[2, 0:64].set(raw['b3'])
    b_slab = b_slab.at[3, 0:256].set(raw['bl'])
    # rows 4..6: actor/critic biases are zero per ModdedRLStarter.init_params

    return {'w_slab': w_slab, 'b_slab': b_slab}, raw


# ----------------------------------------------------------------------------
# Forward wrapper (only obs -> conv1-patch gather happens in XLA; everything else is one kernel)
# ----------------------------------------------------------------------------
def _block_config(B):
    B8 = max(8, ((B + 7) // 8) * 8)
    if B8 <= 128:
        return B8, B8
    return ((B + 127) // 128) * 128, 128


@jax.jit
def modded_rl_starter_forward(params, obs, memory):
    B = obs.shape[0]
    assert obs.shape[1:] == (7, 7, 3)
    B_pad, B_blk = _block_config(B)
    nblk = B_pad // B_blk

    # conv1 im2col in (kh,kw,cin) feature order, grouped by 2x2 pool offset, emitted in bf16.
    x = obs.astype(jnp.bfloat16)
    pcat = jnp.concatenate([x[:, 0:6, 0:6, :], x[:, 0:6, 1:7, :],
                            x[:, 1:7, 0:6, :], x[:, 1:7, 1:7, :]], axis=-1)   # (B,6,6,12)
    pcat = pcat.reshape(B, 3, 2, 3, 2, 12).transpose(2, 4, 0, 1, 3, 5)        # (dh,dw,B,p,q,12)
    patches = jnp.pad(pcat.reshape(4, B, 108), ((0, 0), (0, B_pad - B), (0, 20)))   # K padded 108->128
    # row order (batch-block, pool-offset, row-in-block): each grid step reads one contiguous slab
    patches = patches.reshape(4, nblk, B_blk, 128).transpose(1, 0, 2, 3).reshape(nblk * 4 * B_blk, 128)

    mem = jnp.pad(memory.astype(jnp.float32), ((0, B_pad - B), (0, 0)))       # (B_pad, 128) = [h|c]

    newmem, head = pl.pallas_call(
        fused_forward_kernel,
        out_shape=(jax.ShapeDtypeStruct((B_pad, 2 * EMB), jnp.float32),
                   jax.ShapeDtypeStruct((B_pad, 128), jnp.float32)),
        grid=(nblk,),
        in_specs=[pl.BlockSpec((4 * B_blk, 128), lambda i: (i, 0)),   # conv1 patches (bf16)
                  pl.BlockSpec((B_blk, 2 * EMB), lambda i: (i, 0)),   # memory [h|c]
                  pl.BlockSpec((W_ROWS, 256), lambda i: (0, 0)),      # packed bf16 weight slab
                  pl.BlockSpec((8, 256), lambda i: (0, 0))],          # packed f32 bias slab
        out_specs=(pl.BlockSpec((B_blk, 2 * EMB), lambda i: (i, 0)),
                   pl.BlockSpec((B_blk, 128), lambda i: (i, 0))),
        input_output_aliases={1: 0},   # new memory written in place over the (padded) memory buffer
        compiler_params=pltpu.CompilerParams(dimension_semantics=("parallel",)),
    )(patches, mem, params['w_slab'], params['b_slab'])

    # (Categorical log-prob table, value, new memory) -- matching the PyTorch forward outputs.
    return head[:B, 0:N_ACT], head[:B, N_ACT], newmem[:B]


# ----------------------------------------------------------------------------
# Pure-JAX reference (same bf16 operand rounding as the kernel) for a tolerance check
# ----------------------------------------------------------------------------
def reference_forward(raw, obs, memory):
    f32, bf16 = jnp.float32, jnp.bfloat16
    q = lambda a: a.astype(bf16).astype(f32)   # mimic the kernel's bf16 MXU operand rounding
    conv = lambda a, w: jax.lax.conv_general_dilated(
        q(a), q(w), (1, 1), 'VALID', dimension_numbers=('NHWC', 'HWIO', 'NHWC'))

    B = obs.shape[0]
    y = jax.nn.relu(conv(obs.astype(f32), raw['w1'].reshape(2, 2, 3, 16)) + raw['b1'])   # (B,6,6,16)
    y = y.reshape(B, 3, 2, 3, 2, 16).max(axis=(2, 4))                                    # maxpool 2x2
    y = jax.nn.relu(conv(y, raw['w2'].reshape(2, 2, 16, 32)) + raw['b2'])                # (B,2,2,32)
    y = jax.nn.relu(conv(y, raw['w3'].reshape(2, 2, 32, 64)) + raw['b3'])                # (B,1,1,64)
    x_emb = y.reshape(B, 64)

    h0, c0 = memory[:, :EMB], memory[:, EMB:]
    gates = q(x_emb) @ q(raw['wlx']) + q(h0) @ q(raw['wlh']) + raw['bl']
    i_g = jax.nn.sigmoid(gates[:, :EMB]); f_g = jax.nn.sigmoid(gates[:, EMB:2 * EMB])
    g_g = jnp.tanh(gates[:, 2 * EMB:3 * EMB]); o_g = jax.nn.sigmoid(gates[:, 3 * EMB:])
    c_new = f_g * c0 + i_g * g_g
    h_new = o_g * jnp.tanh(c_new)

    def mlp(emb, w1_, w2_, w3_):
        t1 = jnp.tanh(q(emb) @ q(w1_))
        t2 = jnp.tanh(q(t1) @ q(w2_))
        return q(t2) @ q(w3_)

    logits = mlp(h_new, raw['aw1'], raw['aw2'], raw['aw3'])
    value = mlp(h_new, raw['cw1'], raw['cw2'], raw['cw3'])[:, 0]
    return jax.nn.log_softmax(logits, axis=1), value, jnp.concatenate([h_new, c_new], axis=1)


if __name__ == "__main__":
    key = jax.random.PRNGKey(0)
    kp, ko, km = jax.random.split(key, 3)

    params, raw = init_params(kp)

    B = 2
    obs = jax.random.randint(ko, (B, 7, 7, 3), 0, 11).astype(jnp.float32)   # MiniGrid-like obs
    memory = jax.random.normal(km, (B, 2 * EMB), jnp.float32)               # [h | c] = (B, 128)

    logp, value, new_memory = modded_rl_starter_forward(params, obs, memory)
    jax.block_until_ready((logp, value, new_memory))

    assert logp.shape == (B, N_ACT)
    assert value.shape == (B,)
    assert new_memory.shape == (B, 2 * EMB)
    assert bool(jnp.all(jnp.isfinite(logp)))
    assert bool(jnp.all(jnp.isfinite(value)))
    assert bool(jnp.all(jnp.isfinite(new_memory)))
    # log_softmax rows should exponentiate-sum to ~1
    assert bool(jnp.allclose(jnp.sum(jnp.exp(logp), axis=1), 1.0, atol=1e-3))

    # compare against a pure-JAX reference with matching bf16 operand rounding
    logp_r, value_r, mem_r = reference_forward(raw, obs, memory)
    assert bool(jnp.allclose(logp, logp_r, atol=2e-2, rtol=2e-2))
    assert bool(jnp.allclose(value, value_r, atol=2e-2, rtol=2e-2))
    assert bool(jnp.allclose(new_memory, mem_r, atol=2e-2, rtol=2e-2))

    print("KERNEL_OK")
</pallas_src>

<mosaic_0001>
module attributes {stable_mosaic.version = 11 : i64} {
  func.func @fused_forward_kernel(%arg0: i32, %arg1: memref<32x128xbf16, #tpu.memory_space<vmem>>, %arg2: memref<8x128xf32, #tpu.memory_space<vmem>>, %arg3: memref<848x256xbf16, #tpu.memory_space<vmem>>, %arg4: memref<8x256xf32, #tpu.memory_space<vmem>>, %arg5: memref<8x128xf32, #tpu.memory_space<vmem>>, %arg6: memref<8x128xf32, #tpu.memory_space<vmem>>) attributes {dimension_semantics = [#tpu.dimension_semantics<parallel>], iteration_bounds = array<i64: 1>, scalar_prefetch = 0 : i64, scratch_operands = 0 : i64, tpu.core_type = #tpu.core_type<tc>, window_params = [{transform_indices = @transform_0, window_bounds = array<i64: 32, 128>}, {transform_indices = @transform_1, window_bounds = array<i64: 8, 128>}, {pipeline_mode = #tpu.pipeline_mode<synchronous>, transform_indices = @transform_2, window_bounds = array<i64: 848, 256>}, {pipeline_mode = #tpu.pipeline_mode<synchronous>, transform_indices = @transform_3, window_bounds = array<i64: 8, 256>}, {transform_indices = @transform_4, window_bounds = array<i64: 8, 128>}, {transform_indices = @transform_5, window_bounds = array<i64: 8, 128>}]} {
    %c0 = arith.constant 0 : index
    %c0_0 = arith.constant 0 : index
    %0 = vector.load %arg1[%c0, %c0_0] : memref<32x128xbf16, #tpu.memory_space<vmem>>, vector<32x128xbf16>
    %c0_1 = arith.constant 0 : index
    %c0_2 = arith.constant 0 : index
    %1 = vector.load %arg3[%c0_1, %c0_2] : memref<848x256xbf16, #tpu.memory_space<vmem>>, vector<128x144xbf16>
    %cst = arith.constant dense<0.000000e+00> : vector<32x144xf32>
    %2 = tpu.matmul %0, %1, %cst {dimension_numbers = #tpu.dot_dimension_numbers<[1], [0], [0], [1], [0, 0, 1, 1], [], []>} : vector<32x128xbf16>, vector<128x144xbf16>, vector<32x144xf32> -> vector<32x144xf32>
    %3 = vector.extract_strided_slice %2 {offsets = [0, 0], sizes = [8, 144], strides = [1, 1]} : vector<32x144xf32> to vector<8x144xf32>
    %4 = vector.extract_strided_slice %2 {offsets = [8, 0], sizes = [8, 144], strides = [1, 1]} : vector<32x144xf32> to vector<8x144xf32>
    %5 = arith.maximumf %3, %4 : vector<8x144xf32>
    %6 = vector.extract_strided_slice %2 {offsets = [16, 0], sizes = [8, 144], strides = [1, 1]} : vector<32x144xf32> to vector<8x144xf32>
    %7 = vector.extract_strided_slice %2 {offsets = [24, 0], sizes = [8, 144], strides = [1, 1]} : vector<32x144xf32> to vector<8x144xf32>
    %8 = arith.maximumf %6, %7 : vector<8x144xf32>
    %9 = arith.maximumf %5, %8 : vector<8x144xf32>
    %c0_3 = arith.constant 0 : index
    %c0_4 = arith.constant 0 : index
    %10 = vector.load %arg4[%c0_3, %c0_4] : memref<8x256xf32, #tpu.memory_space<vmem>>, vector<1x144xf32>
    %11 = vector.broadcast %10 : vector<1x144xf32> to vector<8x144xf32>
    %12 = arith.addf %9, %11 : vector<8x144xf32>
    %cst_5 = arith.constant 0.000000e+00 : f32
    %13 = vector.broadcast %cst_5 : f32 to vector<8x144xf32>
    %14 = arith.maximumf %12, %13 : vector<8x144xf32>
    %c128 = arith.constant 128 : index
    %c0_6 = arith.constant 0 : index
    %15 = vector.load %arg3[%c128, %c0_6] : memref<848x256xbf16, #tpu.memory_space<vmem>>, vector<144x128xbf16>
    %16 = arith.truncf %14 : vector<8x144xf32> to vector<8x144xbf16>
    %cst_7 = arith.constant dense<0.000000e+00> : vector<8x128xf32>
    %17 = tpu.matmul %16, %15, %cst_7 {dimension_numbers = #tpu.dot_dimension_numbers<[1], [0], [0], [1], [0, 0, 1, 1], [], []>} : vector<8x144xbf16>, vector<144x128xbf16>, vector<8x128xf32> -> vector<8x128xf32>
    %c1 = arith.constant 1 : index
    %c0_8 = arith.constant 0 : index
    %18 = vector.load %arg4[%c1, %c0_8] : memref<8x256xf32, #tpu.memory_space<vmem>>, vector<1x128xf32>
    %19 = vector.broadcast %18 : vector<1x128xf32> to vector<8x128xf32>
    %20 = arith.addf %17, %19 : vector<8x128xf32>
    %cst_9 = arith.constant 0.000000e+00 : f32
    %21 = vector.broadcast %cst_9 : f32 to vector<8x128xf32>
    %22 = arith.maximumf %20, %21 : vector<8x128xf32>
    %c272 = arith.constant 272 : index
    %c0_10 = arith.constant 0 : index
    %23 = vector.load %arg3[%c272, %c0_10] : memref<848x256xbf16, #tpu.memory_space<vmem>>, vector<128x64xbf16>
    %24 = arith.truncf %22 : vector<8x128xf32> to vector<8x128xbf16>
    %cst_11 = arith.constant dense<0.000000e+00> : vector<8x64xf32>
    %25 = tpu.matmul %24, %23, %cst_11 {dimension_numbers = #tpu.dot_dimension_numbers<[1], [0], [0], [1], [0, 0, 1, 1], [], []>} : vector<8x128xbf16>, vector<128x64xbf16>, vector<8x64xf32> -> vector<8x64xf32>
    %c2 = arith.constant 2 : index
    %c0_12 = arith.constant 0 : index
    %26 = vector.load %arg4[%c2, %c0_12] : memref<8x256xf32, #tpu.memory_space<vmem>>, vector<1x64xf32>
    %27 = vector.broadcast %26 : vector<1x64xf32> to vector<8x64xf32>
    %28 = arith.addf %25, %27 : vector<8x64xf32>
    %cst_13 = arith.constant 0.000000e+00 : f32
    %29 = vector.broadcast %cst_13 : f32 to vector<8x64xf32>
    %30 = arith.maximumf %28, %29 : vector<8x64xf32>
    %c0_14 = arith.constant 0 : index
    %c0_15 = arith.constant 0 : index
    %31 = vector.load %arg2[%c0_14, %c0_15] : memref<8x128xf32, #tpu.memory_space<vmem>>, vector<8x64xf32>
    %c0_16 = arith.constant 0 : index
    %c64 = arith.constant 64 : index
    %32 = vector.load %arg2[%c0_16, %c64] : memref<8x128xf32, #tpu.memory_space<vmem>>, vector<8x64xf32>
    %33 = tpu.concatenate %30, %31 in 1 : vector<8x64xf32>, vector<8x64xf32> -> vector<8x128xf32>
    %c400 = arith.constant 400 : index
    %c0_17 = arith.constant 0 : index
    %34 = vector.load %arg3[%c400, %c0_17] : memref<848x256xbf16, #tpu.memory_space<vmem>>, vector<128x256xbf16>
    %35 = arith.truncf %33 : vector<8x128xf32> to vector<8x128xbf16>
    %cst_18 = arith.constant dense<0.000000e+00> : vector<8x256xf32>
    %36 = tpu.matmul %35, %34, %cst_18 {dimension_numbers = #tpu.dot_dimension_numbers<[1], [0], [0], [1], [0, 0, 1, 1], [], []>} : vector<8x128xbf16>, vector<128x256xbf16>, vector<8x256xf32> -> vector<8x256xf32>
    %c3 = arith.constant 3 : index
    %c0_19 = arith.constant 0 : index
    %37 = vector.load %arg4[%c3, %c0_19] : memref<8x256xf32, #tpu.memory_space<vmem>>, vector<1x256xf32>
    %38 = vector.broadcast %37 : vector<1x256xf32> to vector<8x256xf32>
    %39 = arith.addf %36, %38 : vector<8x256xf32>
    %40 = vector.extract_strided_slice %39 {offsets = [0, 0], sizes = [8, 64], strides = [1, 1]} : vector<8x256xf32> to vector<8x64xf32>
    %41 = arith.negf %40 : vector<8x64xf32>
    %42 = math.exp %41 : vector<8x64xf32>
    %cst_20 = arith.constant 1.000000e+00 : f32
    %43 = vector.broadcast %cst_20 : f32 to vector<8x64xf32>
    %44 = arith.addf %43, %42 : vector<8x64xf32>
    %45 = arith.divf %43, %44 : vector<8x64xf32>
    %46 = vector.extract_strided_slice %39 {offsets = [0, 64], sizes = [8, 64], strides = [1, 1]} : vector<8x256xf32> to vector<8x64xf32>
    %47 = arith.negf %46 : vector<8x64xf32>
    %48 = math.exp %47 : vector<8x64xf32>
    %cst_21 = arith.constant 1.000000e+00 : f32
    %49 = vector.broadcast %cst_21 : f32 to vector<8x64xf32>
    %50 = arith.addf %49, %48 : vector<8x64xf32>
    %51 = arith.divf %49, %50 : vector<8x64xf32>
    %52 = vector.extract_strided_slice %39 {offsets = [0, 128], sizes = [8, 64], strides = [1, 1]} : vector<8x256xf32> to vector<8x64xf32>
    %53 = math.tanh %52 : vector<8x64xf32>
    %54 = vector.extract_strided_slice %39 {offsets = [0, 192], sizes = [8, 64], strides = [1, 1]} : vector<8x256xf32> to vector<8x64xf32>
    %55 = arith.negf %54 : vector<8x64xf32>
    %56 = math.exp %55 : vector<8x64xf32>
    %cst_22 = arith.constant 1.000000e+00 : f32
    %57 = vector.broadcast %cst_22 : f32 to vector<8x64xf32>
    %58 = arith.addf %57, %56 : vector<8x64xf32>
    %59 = arith.divf %57, %58 : vector<8x64xf32>
    %60 = arith.mulf %51, %32 : vector<8x64xf32>
    %61 = arith.mulf %45, %53 : vector<8x64xf32>
    %62 = arith.addf %60, %61 : vector<8x64xf32>
    %63 = math.tanh %62 : vector<8x64xf32>
    %64 = arith.mulf %59, %63 : vector<8x64xf32>
    %c0_23 = arith.constant 0 : index
    %c0_24 = arith.constant 0 : index
    %65 = vector.load %arg5[%c0_23, %c0_24] : memref<8x128xf32, #tpu.memory_space<vmem>>, vector<8x64xf32>
    tpu.vector_store %arg5[%c0_23, %c0_24], %64 {strides = array<i32>} : memref<8x128xf32, #tpu.memory_space<vmem>>, vector<8x64xf32>,
    %c0_25 = arith.constant 0 : index
    %c64_26 = arith.constant 64 : index
    %66 = vector.load %arg5[%c0_25, %c64_26] : memref<8x128xf32, #tpu.memory_space<vmem>>, vector<8x64xf32>
    tpu.vector_store %arg5[%c0_25, %c64_26], %62 {strides = array<i32>} : memref<8x128xf32, #tpu.memory_space<vmem>>, vector<8x64xf32>,
    %c528 = arith.constant 528 : index
    %c0_27 = arith.constant 0 : index
    %67 = vector.load %arg3[%c528, %c0_27] : memref<848x256xbf16, #tpu.memory_space<vmem>>, vector<64x128xbf16>
    %68 = arith.truncf %64 : vector<8x64xf32> to vector<8x64xbf16>
    %cst_28 = arith.constant dense<0.000000e+00> : vector<8x128xf32>
    %69 = tpu.matmul %68, %67, %cst_28 {dimension_numbers = #tpu.dot_dimension_numbers<[1], [0], [0], [1], [0, 0, 1, 1], [], []>} : vector<8x64xbf16>, vector<64x128xbf16>, vector<8x128xf32> -> vector<8x128xf32>
    %c4 = arith.constant 4 : index
    %c0_29 = arith.constant 0 : index
    %70 = vector.load %arg4[%c4, %c0_29] : memref<8x256xf32, #tpu.memory_space<vmem>>, vector<1x128xf32>
    %71 = vector.broadcast %70 : vector<1x128xf32> to vector<8x128xf32>
    %72 = arith.addf %69, %71 : vector<8x128xf32>
    %73 = math.tanh %72 : vector<8x128xf32>
    %c592 = arith.constant 592 : index
    %c0_30 = arith.constant 0 : index
    %74 = vector.load %arg3[%c592, %c0_30] : memref<848x256xbf16, #tpu.memory_space<vmem>>, vector<128x128xbf16>
    %75 = arith.truncf %73 : vector<8x128xf32> to vector<8x128xbf16>
    %cst_31 = arith.constant dense<0.000000e+00> : vector<8x128xf32>
    %76 = tpu.matmul %75, %74, %cst_31 {dimension_numbers = #tpu.dot_dimension_numbers<[1], [0], [0], [1], [0, 0, 1, 1], [], []>} : vector<8x128xbf16>, vector<128x128xbf16>, vector<8x128xf32> -> vector<8x128xf32>
    %c5 = arith.constant 5 : index
    %c0_32 = arith.constant 0 : index
    %77 = vector.load %arg4[%c5, %c0_32] : memref<8x256xf32, #tpu.memory_space<vmem>>, vector<1x128xf32>
    %78 = vector.broadcast %77 : vector<1x128xf32> to vector<8x128xf32>
    %79 = arith.addf %76, %78 : vector<8x128xf32>
    %80 = math.tanh %79 : vector<8x128xf32>
    %c720 = arith.constant 720 : index
    %c0_33 = arith.constant 0 : index
    %81 = vector.load %arg3[%c720, %c0_33] : memref<848x256xbf16, #tpu.memory_space<vmem>>, vector<128x128xbf16>
    %82 = arith.truncf %80 : vector<8x128xf32> to vector<8x128xbf16>
    %cst_34 = arith.constant dense<0.000000e+00> : vector<8x128xf32>
    %83 = tpu.matmul %82, %81, %cst_34 {dimension_numbers = #tpu.dot_dimension_numbers<[1], [0], [0], [1], [0, 0, 1, 1], [], []>} : vector<8x128xbf16>, vector<128x128xbf16>, vector<8x128xf32> -> vector<8x128xf32>
    %c6 = arith.constant 6 : index
    %c0_35 = arith.constant 0 : index
    %84 = vector.load %arg4[%c6, %c0_35] : memref<8x256xf32, #tpu.memory_space<vmem>>, vector<1x128xf32>
    %85 = vector.broadcast %84 : vector<1x128xf32> to vector<8x128xf32>
    %86 = arith.addf %83, %85 : vector<8x128xf32>
    %87 = vector.extract_strided_slice %86 {offsets = [0, 0], sizes = [8, 3], strides = [1, 1]} : vector<8x128xf32> to vector<8x3xf32>
    %cst_36 = arith.constant dense<0xFF800000> : vector<8xf32>
    %88 = vector.multi_reduction <maximumf>, %87, %cst_36 [1] : vector<8x3xf32> to vector<8xf32>
    %89 = vector.shape_cast %88 : vector<8xf32> to vector<8x1xf32>
    %90 = vector.broadcast %89 : vector<8x1xf32> to vector<8x3xf32>
    %91 = arith.subf %87, %90 : vector<8x3xf32>
    %92 = math.exp %91 : vector<8x3xf32>
    %cst_37 = arith.constant dense<0.000000e+00> : vector<8xf32>
    %93 = vector.multi_reduction <add>, %92, %cst_37 [1] : vector<8x3xf32> to vector<8xf32>
    %94 = vector.shape_cast %93 : vector<8xf32> to vector<8x1xf32>
    %95 = math.log %94 : vector<8x1xf32>
    %96 = arith.addf %89, %95 : vector<8x1xf32>
    %97 = tpu.iota {dimensions = array<i32: 1>} : vector<8x128xi32>
    %c3_i32 = arith.constant 3 : i32
    %98 = vector.broadcast %c3_i32 : i32 to vector<8x128xi32>
    %99 = arith.cmpi slt, %97, %98 : vector<8x128xi32>
    %100 = vector.broadcast %96 : vector<8x1xf32> to vector<8x128xf32>
    %101 = arith.subf %86, %100 : vector<8x128xf32>
    %102 = arith.select %99, %101, %86 : vector<8x128xi1>, vector<8x128xf32>
    %c0_38 = arith.constant 0 : index
    %c0_39 = arith.constant 0 : index
    %103 = vector.load %arg6[%c0_38, %c0_39] : memref<8x128xf32, #tpu.memory_space<vmem>>, vector<8x128xf32>
    tpu.vector_store %arg6[%c0_38, %c0_39], %102 {strides = array<i32>} : memref<8x128xf32, #tpu.memory_space<vmem>>, vector<8x128xf32>,
    return
  }
  func.func @transform_0(%arg0: i32) -> (i32, i32) {
    %c0_i32 = arith.constant 0 : i32
    %c0_i32_0 = arith.constant 0 : i32
    return %arg0, %c0_i32 : i32, i32
  }
  func.func @transform_1(%arg0: i32) -> (i32, i32) {
    %c0_i32 = arith.constant 0 : i32
    %c0_i32_0 = arith.constant 0 : i32
    return %arg0, %c0_i32 : i32, i32
  }
  func.func @transform_2(%arg0: i32) -> (i32, i32) {
    %c0_i32 = arith.constant 0 : i32
    %c0_i32_0 = arith.constant 0 : i32
    %c0_i32_1 = arith.constant 0 : i32
    return %c0_i32, %c0_i32_0 : i32, i32
  }
  func.func @transform_3(%arg0: i32) -> (i32, i32) {
    %c0_i32 = arith.constant 0 : i32
    %c0_i32_0 = arith.constant 0 : i32
    %c0_i32_1 = arith.constant 0 : i32
    return %c0_i32, %c0_i32_0 : i32, i32
  }
  func.func @transform_4(%arg0: i32) -> (i32, i32) {
    %c0_i32 = arith.constant 0 : i32
    %c0_i32_0 = arith.constant 0 : i32
    return %arg0, %c0_i32 : i32, i32
  }
  func.func @transform_5(%arg0: i32) -> (i32, i32) {
    %c0_i32 = arith.constant 0 : i32
    %c0_i32_0 = arith.constant 0 : i32
    return %arg0, %c0_i32 : i32, i32
  }
}

</mosaic_0001>

<llo_original>
// kernel: modded_rl_starter_forward.1
$region0: #{modded_rl_starter_forward.1}
  #allocation0 [shape = 'u32[]', space=smem, size = 0x4, offset = 0x4, fixed_abs, tag = 'smem constant byte address 0x4 - core index']
  #allocation1 [shape = 'u32[144,128]{1,0:T(1,128)}', space=vmem, size = 0x12000, scoped, tag = 'internal scratch']
  %s0 = inlined_call_operand.vmem [shape: bf16[32,128], index: 0, kind: input, shape index: {}]
  %s1 = inlined_call_operand.vmem [shape: f32[8,128], index: 1, kind: input, shape index: {}, may-alias: {1,4}]
  %s2 = inlined_call_operand.hbm [shape: bf16[848,256], index: 2, kind: input, shape index: {}]
  %s3 = inlined_call_operand.vmem [shape: f32[8,256], index: 3, kind: input, shape index: {}]
  %s4 = inlined_call_operand.vmem [shape: f32[8,128], index: 4, kind: output, shape index: {0}, may-alias: {1,4}]
  %s5 = inlined_call_operand.vmem [shape: f32[8,128], index: 5, kind: output, shape index: {1}]
  %6 = xla_tuple %s4, %s5
  %s7 = sld [smem:[#allocation0]]
  $region38: #{modded_rl_starter_forward.1} parent=0
    _
  %s9 = ssub.s32 1, %s7
  %s10 = scalar_select 0, %s9, %s7
  $region1: #{modded_rl_starter_forward.1} parent=0
    #allocation2 [shape = 'u8[434176]{0}', space=vmem, size = 0x6a000, scoped, tag = 'input window, operand 2, single buffered']
    #allocation3 [shape = 's32[1]{0}', space=sflag, size = 0x4, scoped, tag = 'scoped memory for modded_rl_starter_forward.1']
    %11 = vsyncpa [#allocation3], 0
    // Predicated region
    $region2: #{modded_rl_starter_forward.1} parent=1 // pred_check
      _
    $region3: #{modded_rl_starter_forward.1} parent=1 // pred_check_branch
      %13 = sbr.rel (0) target = $region5
    $region4: #{modded_rl_starter_forward.1} parent=1 // pred_region
      _
    $region5: #{modded_rl_starter_forward.1} parent=1 // pred_fallthru
      _
    // Predicated region
    $region6: #{modded_rl_starter_forward.1} parent=1 // pred_check
      _
    $region7: #{modded_rl_starter_forward.1} parent=1 // pred_check_branch
      %15 = sbr.rel (0) target = $region9
    $region8: #{modded_rl_starter_forward.1} parent=1 // pred_region
      _
    $region9: #{modded_rl_starter_forward.1} parent=1 // pred_fallthru
      _
    // Predicated region
    $region10: #{modded_rl_starter_forward.1} parent=1 // pred_check
      _
    $region11: #{modded_rl_starter_forward.1} parent=1 // pred_check_branch
      %17 = sbr.rel (0) target = $region13
    $region12: #{modded_rl_starter_forward.1} parent=1 // pred_region
      %s19 = ssub.s32 13568, 13568
      %20 = vsyncadd [#allocation3], %s19
      %s21 = sshll.u32 [#allocation2], 4
      %s22 = int_to_ptr.vmem [resolvable:$true] %s21
      %27 = dma.hbm_to_vmem [thread:$0]  %s2, 13568, %s22, [#allocation3], 128, 128, 8
    $region13: #{modded_rl_starter_forward.1} parent=1 // pred_fallthru
      _
    // Predicated region
    $region14: #{modded_rl_starter_forward.1} parent=1 // pred_check
      _
    $region15: #{modded_rl_starter_forward.1} parent=1 // pred_check_branch
      %29 = sbr.rel (0) target = $region17
    $region16: #{modded_rl_starter_forward.1} parent=1 // pred_region
      _
    $region17: #{modded_rl_starter_forward.1} parent=1 // pred_fallthru
      _
    // Predicated region
    $region18: #{modded_rl_starter_forward.1} parent=1 // pred_check
      _
    $region19: #{modded_rl_starter_forward.1} parent=1 // pred_check_branch
      %31 = sbr.rel (0) target = $region21
    $region20: #{modded_rl_starter_forward.1} parent=1 // pred_region
      %32 = dma.done [#allocation3], 13568
    $region21: #{modded_rl_starter_forward.1} parent=1 // pred_fallthru
      _
    %v34 = vld [vmem:[%s0] sm:$0xf]
    %v35 = vld [vmem:[%s0 + $0x4] sm:$0xf]
    %v36 = vld [vmem:[%s0 + $0x8] sm:$0xf]
    %v37 = vld [vmem:[%s0 + $0xc] sm:$0xf]
    %v38 = vld [vmem:[#allocation2] sm:$0xff]
    %v39 = vld [vmem:[#allocation2 + $0x8] sm:$0xff]
    %v40 = vld [vmem:[#allocation2 + $0x10] sm:$0xff]
    %v41 = vld [vmem:[#allocation2 + $0x18] sm:$0xff]
    %v42 = vld [vmem:[#allocation2 + $0x20] sm:$0xff]
    %v43 = vld [vmem:[#allocation2 + $0x28] sm:$0xff]
    %v44 = vld [vmem:[#allocation2 + $0x30] sm:$0xff]
    %v45 = vld [vmem:[#allocation2 + $0x38] sm:$0xff]
    %v46 = vld [vmem:[#allocation2 + $0x40] sm:$0xff]
    %v47 = vld [vmem:[#allocation2 + $0x48] sm:$0xff]
    %v48 = vld [vmem:[#allocation2 + $0x50] sm:$0xff]
    %v49 = vld [vmem:[#allocation2 + $0x58] sm:$0xff]
    %v50 = vld [vmem:[#allocation2 + $0x60] sm:$0xff]
    %v51 = vld [vmem:[#allocation2 + $0x68] sm:$0xff]
    %v52 = vld [vmem:[#allocation2 + $0x70] sm:$0xff]
    %v53 = vld [vmem:[#allocation2 + $0x78] sm:$0xff]
    %v58 = vunpack.c.l.b16 %v34
    %v59 = vunpack.c.l.b16 %v35
    %v60 = vunpack.c.l.b16 %v36
    %v61 = vunpack.c.l.b16 %v37
    %v62 = vpack.c.b16 %v59, %v58
    %v63 = vpack.c.b16 %v61, %v60
    %v82 = vunpack.c.l.b16 %v38
    %v83 = vunpack.c.h.b16 %v38
    %v84 = vunpack.c.l.b16 %v39
    %v85 = vunpack.c.h.b16 %v39
    %v86 = vunpack.c.l.b16 %v40
    %v87 = vunpack.c.h.b16 %v40
    %v88 = vunpack.c.l.b16 %v41
    %v89 = vunpack.c.h.b16 %v41
    %v90 = vunpack.c.l.b16 %v42
    %v91 = vunpack.c.h.b16 %v42
    %v92 = vunpack.c.l.b16 %v43
    %v93 = vunpack.c.h.b16 %v43
    %v94 = vunpack.c.l.b16 %v44
    %v95 = vunpack.c.h.b16 %v44
    %v96 = vunpack.c.l.b16 %v45
    %v97 = vunpack.c.h.b16 %v45
    %v98 = vunpack.c.l.b16 %v46
    %v99 = vunpack.c.h.b16 %v46
    %v100 = vunpack.c.l.b16 %v47
    %v101 = vunpack.c.h.b16 %v47
    %v102 = vunpack.c.l.b16 %v48
    %v103 = vunpack.c.h.b16 %v48
    %v104 = vunpack.c.l.b16 %v49
    %v105 = vunpack.c.h.b16 %v49
    %v106 = vunpack.c.l.b16 %v50
    %v107 = vunpack.c.h.b16 %v50
    %v108 = vunpack.c.l.b16 %v51
    %v109 = vunpack.c.h.b16 %v51
    %v110 = vunpack.c.l.b16 %v52
    %v111 = vunpack.c.h.b16 %v52
    %v112 = vunpack.c.l.b16 %v53
    %v113 = vunpack.c.h.b16 %v53
    %v114 = vpack.c.b16 %v84, %v82
    %v115 = vpack.c.b16 %v85, %v83
    %v116 = vpack.c.b16 %v88, %v86
    %v117 = vpack.c.b16 %v89, %v87
    %v118 = vpack.c.b16 %v92, %v90
    %v119 = vpack.c.b16 %v93, %v91
    %v120 = vpack.c.b16 %v96, %v94
    %v121 = vpack.c.b16 %v97, %v95
    %v122 = vpack.c.b16 %v100, %v98
    %v123 = vpack.c.b16 %v101, %v99
    %v124 = vpack.c.b16 %v104, %v102
    %v125 = vpack.c.b16 %v105, %v103
    %v126 = vpack.c.b16 %v108, %v106
    %v127 = vpack.c.b16 %v109, %v107
    %v128 = vpack.c.b16 %v112, %v110
    %v129 = vpack.c.b16 %v113, %v111
    %146 = vmatprep.subr.bf16.mxu0 %v129
    %147 = vmatpush1.bf16.msra.mxu0 %v128
    %148 = vmatprep.subr.bf16.mxu0 %v127
    %149 = vmatpush1.bf16.msra.mxu0 %v126
    %150 = vmatprep.subr.bf16.mxu0 %v125
    %151 = vmatpush1.bf16.msra.mxu0 %v124
    %152 = vmatprep.subr.bf16.mxu0 %v123
    %153 = vmatpush1.bf16.msra.mxu0 %v122
    %154 = vmatprep.subr.bf16.mxu0 %v121
    %155 = vmatpush1.bf16.msra.mxu0 %v120
    %156 = vmatprep.subr.bf16.mxu0 %v119
    %157 = vmatpush1.bf16.msra.mxu0 %v118
    %158 = vmatprep.subr.bf16.mxu0 %v117
    %159 = vmatpush1.bf16.msra.mxu0 %v116
    %160 = vmatprep.subr.bf16.mxu0 %v115
    %161 = vmatpush1.bf16.msra.mxu0 %v114
    %162 = vmatprep.subr.bf16.mxu0 0
    %163 = vmatpush2.bf16.msra.mxu0 0
    %164 = vmatprep.subr.bf16.mxu0 0
    %165 = vmatpush2.bf16.msra.mxu0 0
    %166 = vmatprep.subr.bf16.mxu0 0
    %167 = vmatpush2.bf16.msra.mxu0 0
    %168 = vmatprep.subr.bf16.mxu0 0
    %169 = vmatpush2.bf16.msra.mxu0 0
    %170 = vmatprep.subr.bf16.mxu0 0
    %171 = vmatpush2.bf16.msra.mxu0 0
    %172 = vmatprep.subr.bf16.mxu0 0
    %173 = vmatpush2.bf16.msra.mxu0 0
    %174 = vmatprep.subr.bf16.mxu0 0
    %175 = vmatpush2.bf16.msra.mxu0 0
    %176 = vmatprep.subr.bf16.mxu0 0
    %177 = vmatpush2.bf16.msra.mxu0 0
    %178 = vmatprep.mubr.bf16.mxu0 0
    %179 = vmatmul.mubr.bf16.gmra.mxu0 %v62
    %v180 = vpop.f32.mrf.mxu0
    %v181 = vadd.f32 0.0, %v180
    %v182 = vpop.f32.mrf.mxu0
    %v183 = vadd.f32 0.0, %v182
    %v184 = vpop.f32.mrf.mxu0
    %v185 = vadd.f32 0.0, %v184
    %v186 = vpop.f32.mrf.mxu0
    %v187 = vadd.f32 0.0, %v186
    %188 = vmatprep.mubr.bf16.mxu0 0
    %189 = vmatmul.mubr.bf16.gmra.mxu0 %v63
    %v190 = vpop.f32.mrf.mxu0
    %v191 = vadd.f32 0.0, %v190
    %v192 = vpop.f32.mrf.mxu0
    %v193 = vadd.f32 0.0, %v192
    %v194 = vpop.f32.mrf.mxu0
    %v195 = vadd.f32 0.0, %v194
    %v196 = vpop.f32.mrf.mxu0
    %v197 = vadd.f32 0.0, %v196
    %198 = vdwg.mxu0
    %v199 = vmax.f32 %v181, %v185
    %v200 = vmax.f32 %v183, %v187
    %v201 = vmax.f32 %v191, %v195
    %v202 = vmax.f32 %v193, %v197
    %v203 = vmax.f32 %v199, %v201
    %v204 = vmax.f32 %v200, %v202
    %v205 = vld [vmem:[%s3] ss:$8 sm:$0x3]
    %v207 = vlaneseq
    %v208 = vshrl.u32 %v207, 7
    %v209 = vsub.s32 0, %v208
    %v210 = vrot.slane %v205, %v209
    %v211 = vlaneseq
    %v212 = vshrl.u32 %v211, 7
    %v213 = vsub.s32 1, %v212
    %v214 = vrot.slane %v205, %v213
    %v217 = vadd.f32 %v203, %v210
    %v218 = vadd.f32 %v204, %v214
    %v219 = vmax.f32 %v217, 0.0
    %v220 = vmax.f32 %v218, 0.0
    %v221 = vld [vmem:[#allocation2 + $0x80] sm:$0xf]
    %v222 = vld [vmem:[#allocation2 + $0x88] sm:$0xf]
    %v223 = vld [vmem:[#allocation2 + $0x90] sm:$0xf]
    %v224 = vld [vmem:[#allocation2 + $0x98] sm:$0xf]
    %v225 = vld [vmem:[#allocation2 + $0xa0] sm:$0xf]
    %v226 = vld [vmem:[#allocation2 + $0xa8] sm:$0xf]
    %v227 = vld [vmem:[#allocation2 + $0xb0] sm:$0xf]
    %v228 = vld [vmem:[#allocation2 + $0xb8] sm:$0xf]
    %v229 = vld [vmem:[#allocation2 + $0xc0] sm:$0xf]
    %v230 = vld [vmem:[#allocation2 + $0xc8] sm:$0xf]
    %v231 = vld [vmem:[#allocation2 + $0xd0] sm:$0xf]
    %v232 = vld [vmem:[#allocation2 + $0xd8] sm:$0xf]
    %v233 = vld [vmem:[#allocation2 + $0xe0] sm:$0xf]
    %v234 = vld [vmem:[#allocation2 + $0xe8] sm:$0xf]
    %v235 = vld [vmem:[#allocation2 + $0xf0] sm:$0xf]
    %v236 = vld [vmem:[#allocation2 + $0xf8] sm:$0xf]
    %v237 = vld [vmem:[#allocation2 + $0x100] sm:$0xf]
    %v238 = vld [vmem:[#allocation2 + $0x108] sm:$0xf]
    %v239 = vpack.c.bf16 %v219, %v219
    %v240 = vpack.c.bf16 %v220, %v220
    %v241 = vld [vmem:[%s3 + $0x1] ss:$0 sm:$0xff]
    %v260 = vunpack.c.l.b16 %v221
    %v261 = vunpack.c.l.b16 %v222
    %v262 = vunpack.c.l.b16 %v223
    %v263 = vunpack.c.l.b16 %v224
    %v264 = vunpack.c.l.b16 %v225
    %v265 = vunpack.c.l.b16 %v226
    %v266 = vunpack.c.l.b16 %v227
    %v267 = vunpack.c.l.b16 %v228
    %v268 = vunpack.c.l.b16 %v229
    %v269 = vunpack.c.l.b16 %v230
    %v270 = vunpack.c.l.b16 %v231
    %v271 = vunpack.c.l.b16 %v232
    %v272 = vunpack.c.l.b16 %v233
    %v273 = vunpack.c.l.b16 %v234
    %v274 = vunpack.c.l.b16 %v235
    %v275 = vunpack.c.l.b16 %v236
    %v276 = vunpack.c.l.b16 %v237
    %v277 = vunpack.c.l.b16 %v238
    %v278 = vpack.c.b16 %v261, %v260
    %v279 = vpack.c.b16 %v263, %v262
    %v280 = vpack.c.b16 %v265, %v264
    %v281 = vpack.c.b16 %v267, %v266
    %v282 = vpack.c.b16 %v269, %v268
    %v283 = vpack.c.b16 %v271, %v270
    %v284 = vpack.c.b16 %v273, %v272
    %v285 = vpack.c.b16 %v275, %v274
    %v286 = vpack.c.b16 %v277, %v276
    %vm296 = vcmask 130048
    %v298 = vsel %vm296, %v240, 0
    %300 = vmatprep.subr.bf16.mxu0 0
    %301 = vmatpush1.bf16.msra.mxu0 %v285
    %302 = vmatprep.subr.bf16.mxu0 0
    %303 = vmatpush1.bf16.msra.mxu0 %v284
    %304 = vmatprep.subr.bf16.mxu0 0
    %305 = vmatpush1.bf16.msra.mxu0 %v283
    %306 = vmatprep.subr.bf16.mxu0 0
    %307 = vmatpush1.bf16.msra.mxu0 %v282
    %308 = vmatprep.subr.bf16.mxu0 0
    %309 = vmatpush1.bf16.msra.mxu0 %v281
    %310 = vmatprep.subr.bf16.mxu0 0
    %311 = vmatpush1.bf16.msra.mxu0 %v280
    %312 = vmatprep.subr.bf16.mxu0 0
    %313 = vmatpush1.bf16.msra.mxu0 %v279
    %314 = vmatprep.subr.bf16.mxu0 0
    %315 = vmatpush1.bf16.msra.mxu0 %v278
    %316 = vmatprep.subr.bf16.mxu0 0
    %317 = vmatpush2.bf16.msra.mxu0 0
    %318 = vmatprep.subr.bf16.mxu0 0
    %319 = vmatpush2.bf16.msra.mxu0 0
    %320 = vmatprep.subr.bf16.mxu0 0
    %321 = vmatpush2.bf16.msra.mxu0 0
    %322 = vmatprep.subr.bf16.mxu0 0
    %323 = vmatpush2.bf16.msra.mxu0 0
    %324 = vmatprep.subr.bf16.mxu0 0
    %325 = vmatpush2.bf16.msra.mxu0 0
    %326 = vmatprep.subr.bf16.mxu0 0
    %327 = vmatpush2.bf16.msra.mxu0 0
    %328 = vmatprep.subr.bf16.mxu0 0
    %329 = vmatpush2.bf16.msra.mxu0 0
    %330 = vmatprep.subr.bf16.mxu0 0
    %331 = vmatpush2.bf16.msra.mxu0 %v286
    %332 = vmatprep.mubr.bf16.mxu0 %v298
    %333 = vmatmul.mubr.bf16.gmra.mxu0 %v239
    %v334 = vpop.f32.mrf.mxu0
    %v335 = vadd.f32 %v241, %v334
    %v336 = vpop.f32.mrf.mxu0
    %v337 = vpop.f32.mrf.mxu0
    %v338 = vpop.f32.mrf.mxu0
    %339 = vdwg.mxu0
    %v340 = vmax.f32 %v335, 0.0
    %v341 = vld [vmem:[#allocation2 + $0x110] sm:$0xf]
    %v342 = vld [vmem:[#allocation2 + $0x118] sm:$0xf]
    %v343 = vld [vmem:[#allocation2 + $0x120] sm:$0xf]
    %v344 = vld [vmem:[#allocation2 + $0x128] sm:$0xf]
    %v345 = vld [vmem:[#allocation2 + $0x130] sm:$0xf]
    %v346 = vld [vmem:[#allocation2 + $0x138] sm:$0xf]
    %v347 = vld [vmem:[#allocation2 + $0x140] sm:$0xf]
    %v348 = vld [vmem:[#allocation2 + $0x148] sm:$0xf]
    %v349 = vld [vmem:[#allocation2 + $0x150] sm:$0xf]
    %v350 = vld [vmem:[#allocation2 + $0x158] sm:$0xf]
    %v351 = vld [vmem:[#allocation2 + $0x160] sm:$0xf]
    %v352 = vld [vmem:[#allocation2 + $0x168] sm:$0xf]
    %v353 = vld [vmem:[#allocation2 + $0x170] sm:$0xf]
    %v354 = vld [vmem:[#allocation2 + $0x178] sm:$0xf]
    %v355 = vld [vmem:[#allocation2 + $0x180] sm:$0xf]
    %v356 = vld [vmem:[#allocation2 + $0x188] sm:$0xf]
    %v357 = vpack.c.bf16 %v340, %v340
    %v358 = vld [vmem:[%s3 + $0x2] ss:$0 sm:$0xff]
    %v375 = vunpack.c.l.b16 %v341
    %v376 = vunpack.c.l.b16 %v342
    %v377 = vunpack.c.l.b16 %v343
    %v378 = vunpack.c.l.b16 %v344
    %v379 = vunpack.c.l.b16 %v345
    %v380 = vunpack.c.l.b16 %v346
    %v381 = vunpack.c.l.b16 %v347
    %v382 = vunpack.c.l.b16 %v348
    %v383 = vunpack.c.l.b16 %v349
    %v384 = vunpack.c.l.b16 %v350
    %v385 = vunpack.c.l.b16 %v351
    %v386 = vunpack.c.l.b16 %v352
    %v387 = vunpack.c.l.b16 %v353
    %v388 = vunpack.c.l.b16 %v354
    %v389 = vunpack.c.l.b16 %v355
    %v390 = vunpack.c.l.b16 %v356
    %v391 = vpack.c.b16 %v376, %v375
    %v392 = vpack.c.b16 %v378, %v377
    %v393 = vpack.c.b16 %v380, %v379
    %v394 = vpack.c.b16 %v382, %v381
    %v395 = vpack.c.b16 %v384, %v383
    %v396 = vpack.c.b16 %v386, %v385
    %v397 = vpack.c.b16 %v388, %v387
    %v398 = vpack.c.b16 %v390, %v389
    %407 = vmatprep.subr.bf16.mxu0 0
    %408 = vmatpush1.bf16.msra.mxu0 %v398
    %409 = vmatprep.subr.bf16.mxu0 0
    %410 = vmatpush1.bf16.msra.mxu0 %v397
    %411 = vmatprep.subr.bf16.mxu0 0
    %412 = vmatpush1.bf16.msra.mxu0 %v396
    %413 = vmatprep.subr.bf16.mxu0 0
    %414 = vmatpush1.bf16.msra.mxu0 %v395
    %415 = vmatprep.subr.bf16.mxu0 0
    %416 = vmatpush1.bf16.msra.mxu0 %v394
    %417 = vmatprep.subr.bf16.mxu0 0
    %418 = vmatpush1.bf16.msra.mxu0 %v393
    %419 = vmatprep.subr.bf16.mxu0 0
    %420 = vmatpush1.bf16.msra.mxu0 %v392
    %421 = vmatprep.subr.bf16.mxu0 0
    %422 = vmatpush1.bf16.msra.mxu0 %v391
    %423 = vmatprep.subr.bf16.mxu0 0
    %424 = vmatpush2.bf16.msra.mxu0 0
    %425 = vmatprep.subr.bf16.mxu0 0
    %426 = vmatpush2.bf16.msra.mxu0 0
    %427 = vmatprep.subr.bf16.mxu0 0
    %428 = vmatpush2.bf16.msra.mxu0 0
    %429 = vmatprep.subr.bf16.mxu0 0
    %430 = vmatpush2.bf16.msra.mxu0 0
    %431 = vmatprep.subr.bf16.mxu0 0
    %432 = vmatpush2.bf16.msra.mxu0 0
    %433 = vmatprep.subr.bf16.mxu0 0
    %434 = vmatpush2.bf16.msra.mxu0 0
    %435 = vmatprep.subr.bf16.mxu0 0
    %436 = vmatpush2.bf16.msra.mxu0 0
    %437 = vmatprep.subr.bf16.mxu0 0
    %438 = vmatpush2.bf16.msra.mxu0 0
    %439 = vmatprep.mubr.bf16.mxu0 0
    %440 = vmatmul.mubr.bf16.gmra.mxu0 %v357
    %v441 = vpop.f32.mrf.mxu0
    %v442 = vadd.f32 %v358, %v441
    %v443 = vpop.f32.mrf.mxu0
    %v444 = vpop.f32.mrf.mxu0
    %v445 = vpop.f32.mrf.mxu0
    %446 = vdwg.mxu0
    %v447 = vmax.f32 %v442, 0.0
    %v448 = vld [vmem:[%s1] sm:$0xff]
    %450 = vrot.lane.b32.xlu0 %v448, 64
    %v451 = vpop.permute.xlu0 %450
    %vm453 = vcmask 523264
    %v454 = vsel %vm453, %v447, %v451
    %v455 = vld [vmem:[#allocation2 + $0x190] sm:$0xff]
    %v456 = vld [vmem:[#allocation2 + $0x198] sm:$0xff]
    %v457 = vld [vmem:[#allocation2 + $0x1a0] sm:$0xff]
    %v458 = vld [vmem:[#allocation2 + $0x1a8] sm:$0xff]
    %v459 = vld [vmem:[#allocation2 + $0x1b0] sm:$0xff]
    %v460 = vld [vmem:[#allocation2 + $0x1b8] sm:$0xff]
    %v461 = vld [vmem:[#allocation2 + $0x1c0] sm:$0xff]
    %v462 = vld [vmem:[#allocation2 + $0x1c8] sm:$0xff]
    %v463 = vld [vmem:[#allocation2 + $0x1d0] sm:$0xff]
    %v464 = vld [vmem:[#allocation2 + $0x1d8] sm:$0xff]
    %v465 = vld [vmem:[#allocation2 + $0x1e0] sm:$0xff]
    %v466 = vld [vmem:[#allocation2 + $0x1e8] sm:$0xff]
    %v467 = vld [vmem:[#allocation2 + $0x1f0] sm:$0xff]
    %v468 = vld [vmem:[#allocation2 + $0x1f8] sm:$0xff]
    %v469 = vld [vmem:[#allocation2 + $0x200] sm:$0xff]
    %v470 = vld [vmem:[#allocation2 + $0x208] sm:$0xff]
    %v471 = vpack.c.bf16 %v454, %v454
    %s472 = scalar_lea.vmem %s3, 3
    %v473 = vld [vmem:[%s472] ss:$8 sm:$0x3]
    %v475 = vlaneseq
    %v476 = vshrl.u32 %v475, 7
    %v477 = vsub.s32 0, %v476
    %v478 = vrot.slane %v473, %v477
    %v479 = vlaneseq
    %v480 = vshrl.u32 %v479, 7
    %v481 = vsub.s32 1, %v480
    %v482 = vrot.slane %v473, %v481
    %v501 = vunpack.c.l.b16 %v455
    %v502 = vunpack.c.h.b16 %v455
    %v503 = vunpack.c.l.b16 %v456
    %v504 = vunpack.c.h.b16 %v456
    %v505 = vunpack.c.l.b16 %v457
    %v506 = vunpack.c.h.b16 %v457
    %v507 = vunpack.c.l.b16 %v458
    %v508 = vunpack.c.h.b16 %v458
    %v509 = vunpack.c.l.b16 %v459
    %v510 = vunpack.c.h.b16 %v459
    %v511 = vunpack.c.l.b16 %v460
    %v512 = vunpack.c.h.b16 %v460
    %v513 = vunpack.c.l.b16 %v461
    %v514 = vunpack.c.h.b16 %v461
    %v515 = vunpack.c.l.b16 %v462
    %v516 = vunpack.c.h.b16 %v462
    %v517 = vunpack.c.l.b16 %v463
    %v518 = vunpack.c.h.b16 %v463
    %v519 = vunpack.c.l.b16 %v464
    %v520 = vunpack.c.h.b16 %v464
    %v521 = vunpack.c.l.b16 %v465
    %v522 = vunpack.c.h.b16 %v465
    %v523 = vunpack.c.l.b16 %v466
    %v524 = vunpack.c.h.b16 %v466
    %v525 = vunpack.c.l.b16 %v467
    %v526 = vunpack.c.h.b16 %v467
    %v527 = vunpack.c.l.b16 %v468
    %v528 = vunpack.c.h.b16 %v468
    %v529 = vunpack.c.l.b16 %v469
    %v530 = vunpack.c.h.b16 %v469
    %v531 = vunpack.c.l.b16 %v470
    %v532 = vunpack.c.h.b16 %v470
    %v533 = vpack.c.b16 %v503, %v501
    %v534 = vpack.c.b16 %v504, %v502
    %v535 = vpack.c.b16 %v507, %v505
    %v536 = vpack.c.b16 %v508, %v506
    %v537 = vpack.c.b16 %v511, %v509
    %v538 = vpack.c.b16 %v512, %v510
    %v539 = vpack.c.b16 %v515, %v513
    %v540 = vpack.c.b16 %v516, %v514
    %v541 = vpack.c.b16 %v519, %v517
    %v542 = vpack.c.b16 %v520, %v518
    %v543 = vpack.c.b16 %v523, %v521
    %v544 = vpack.c.b16 %v524, %v522
    %v545 = vpack.c.b16 %v527, %v525
    %v546 = vpack.c.b16 %v528, %v526
    %v547 = vpack.c.b16 %v531, %v529
    %v548 = vpack.c.b16 %v532, %v530
    %565 = vmatprep.subr.bf16.mxu0 %v548
    %566 = vmatpush1.bf16.msra.mxu0 %v547
    %567 = vmatprep.subr.bf16.mxu0 %v546
    %568 = vmatpush1.bf16.msra.mxu0 %v545
    %569 = vmatprep.subr.bf16.mxu0 %v544
    %570 = vmatpush1.bf16.msra.mxu0 %v543
    %571 = vmatprep.subr.bf16.mxu0 %v542
    %572 = vmatpush1.bf16.msra.mxu0 %v541
    %573 = vmatprep.subr.bf16.mxu0 %v540
    %574 = vmatpush1.bf16.msra.mxu0 %v539
    %575 = vmatprep.subr.bf16.mxu0 %v538
    %576 = vmatpush1.bf16.msra.mxu0 %v537
    %577 = vmatprep.subr.bf16.mxu0 %v536
    %578 = vmatpush1.bf16.msra.mxu0 %v535
    %579 = vmatprep.subr.bf16.mxu0 %v534
    %580 = vmatpush1.bf16.msra.mxu0 %v533
    %581 = vmatprep.subr.bf16.mxu0 0
    %582 = vmatpush2.bf16.msra.mxu0 0
    %583 = vmatprep.subr.bf16.mxu0 0
    %584 = vmatpush2.bf16.msra.mxu0 0
    %585 = vmatprep.subr.bf16.mxu0 0
    %586 = vmatpush2.bf16.msra.mxu0 0
    %587 = vmatprep.subr.bf16.mxu0 0
    %588 = vmatpush2.bf16.msra.mxu0 0
    %589 = vmatprep.subr.bf16.mxu0 0
    %590 = vmatpush2.bf16.msra.mxu0 0
    %591 = vmatprep.subr.bf16.mxu0 0
    %592 = vmatpush2.bf16.msra.mxu0 0
    %593 = vmatprep.subr.bf16.mxu0 0
    %594 = vmatpush2.bf16.msra.mxu0 0
    %595 = vmatprep.subr.bf16.mxu0 0
    %596 = vmatpush2.bf16.msra.mxu0 0
    %597 = vmatprep.mubr.bf16.mxu0 0
    %598 = vmatmul.mubr.bf16.gmra.mxu0 %v471
    %v599 = vpop.f32.mrf.mxu0
    %v600 = vadd.f32 %v478, %v599
    %v601 = vpop.f32.mrf.mxu0
    %v602 = vadd.f32 %v482, %v601
    %v603 = vpop.f32.mrf.mxu0
    %v604 = vpop.f32.mrf.mxu0
    %605 = vdwg.mxu0
    %v606 = vxor.u32 %v600, 2147483648
    %v607 = vmul.f32 %v606, 1.442695
    %v608 = vpow.pop %v607
    %v609 = vadd.f32 %v608, 1.0
    %v610 = vrcp.pop %v609
    %v611 = vmul.f32 1.0, %v610
    %v612 = vtanh.pop %v602
    %v613 = vxor.u32 %v602, 2147483648
    %v614 = vmul.f32 %v613, 1.442695
    %v615 = vpow.pop %v614
    %v616 = vadd.f32 %v615, 1.0
    %v617 = vrcp.pop %v616
    %v618 = vmul.f32 1.0, %v617
    %v619 = vmul.f32 %v611, %v448
    %v620 = vmul.f32 %v611, %v612
    %622 = vrot.lane.b32.xlu0 %v620, 64
    %v623 = vpop.permute.xlu0 %622
    %v625 = vadd.f32 %v619, %v623
    %v626 = vtanh.pop %v625
    %v627 = vmul.f32 %v618, %v626
    %629 = vrot.lane.b32.xlu0 %v627, 64
    %v630 = vpop.permute.xlu0 %629
    %632 = vst.msk [vmem:[%s4] sm:$0xff] %vm453, %v630
    %vm633 = vcmask 1048064
    %634 = vst.msk [vmem:[%s4] sm:$0xff] %vm633, %v625
    %v635 = vld [vmem:[#allocation2 + $0x210] sm:$0xf]
    %v636 = vld [vmem:[#allocation2 + $0x218] sm:$0xf]
    %v637 = vld [vmem:[#allocation2 + $0x220] sm:$0xf]
    %v638 = vld [vmem:[#allocation2 + $0x228] sm:$0xf]
    %v639 = vld [vmem:[#allocation2 + $0x230] sm:$0xf]
    %v640 = vld [vmem:[#allocation2 + $0x238] sm:$0xf]
    %v641 = vld [vmem:[#allocation2 + $0x240] sm:$0xf]
    %v642 = vld [vmem:[#allocation2 + $0x248] sm:$0xf]
    %v643 = vpack.c.bf16 %v627, %v627
    %v644 = vld [vmem:[%s3 + $0x4] ss:$0 sm:$0xff]
    %646 = vrot.lane.b32.xlu0 %v643, 64
    %v647 = vpop.permute.xlu0 %646
    %v656 = vunpack.c.l.b16 %v635
    %v657 = vunpack.c.l.b16 %v636
    %v658 = vunpack.c.l.b16 %v637
    %v659 = vunpack.c.l.b16 %v638
    %v660 = vunpack.c.l.b16 %v639
    %v661 = vunpack.c.l.b16 %v640
    %v662 = vunpack.c.l.b16 %v641
    %v663 = vunpack.c.l.b16 %v642
    %v664 = vpack.c.b16 %v657, %v656
    %v665 = vpack.c.b16 %v659, %v658
    %v666 = vpack.c.b16 %v661, %v660
    %v667 = vpack.c.b16 %v663, %v662
    %v673 = vsel %vm453, %v647, 0
    %675 = vmatprep.subr.bf16.mxu0 0
    %676 = vmatpush1.bf16.msra.mxu0 0
    %677 = vmatprep.subr.bf16.mxu0 0
    %678 = vmatpush1.bf16.msra.mxu0 0
    %679 = vmatprep.subr.bf16.mxu0 0
    %680 = vmatpush1.bf16.msra.mxu0 0
    %681 = vmatprep.subr.bf16.mxu0 0
    %682 = vmatpush1.bf16.msra.mxu0 0
    %683 = vmatprep.subr.bf16.mxu0 0
    %684 = vmatpush1.bf16.msra.mxu0 %v667
    %685 = vmatprep.subr.bf16.mxu0 0
    %686 = vmatpush1.bf16.msra.mxu0 %v666
    %687 = vmatprep.subr.bf16.mxu0 0
    %688 = vmatpush1.bf16.msra.mxu0 %v665
    %689 = vmatprep.subr.bf16.mxu0 0
    %690 = vmatpush1.bf16.msra.mxu0 %v664
    %691 = vmatprep.subr.bf16.mxu0 0
    %692 = vmatpush2.bf16.msra.mxu0 0
    %693 = vmatprep.subr.bf16.mxu0 0
    %694 = vmatpush2.bf16.msra.mxu0 0
    %695 = vmatprep.subr.bf16.mxu0 0
    %696 = vmatpush2.bf16.msra.mxu0 0
    %697 = vmatprep.subr.bf16.mxu0 0
    %698 = vmatpush2.bf16.msra.mxu0 0
    %699 = vmatprep.subr.bf16.mxu0 0
    %700 = vmatpush2.bf16.msra.mxu0 0
    %701 = vmatprep.subr.bf16.mxu0 0
    %702 = vmatpush2.bf16.msra.mxu0 0
    %703 = vmatprep.subr.bf16.mxu0 0
    %704 = vmatpush2.bf16.msra.mxu0 0
    %705 = vmatprep.subr.bf16.mxu0 0
    %706 = vmatpush2.bf16.msra.mxu0 0
    %707 = vmatprep.mubr.bf16.mxu0 0
    %708 = vmatmul.mubr.bf16.gmra.mxu0 %v673
    %v709 = vpop.f32.mrf.mxu0
    %v710 = vadd.f32 %v644, %v709
    %v711 = vpop.f32.mrf.mxu0
    %v712 = vpop.f32.mrf.mxu0
    %v713 = vpop.f32.mrf.mxu0
    %714 = vdwg.mxu0
    %v715 = vtanh.pop %v710
    %v716 = vld [vmem:[#allocation2 + $0x250] sm:$0xf]
    %v717 = vld [vmem:[#allocation2 + $0x258] sm:$0xf]
    %v718 = vld [vmem:[#allocation2 + $0x260] sm:$0xf]
    %v719 = vld [vmem:[#allocation2 + $0x268] sm:$0xf]
    %v720 = vld [vmem:[#allocation2 + $0x270] sm:$0xf]
    %v721 = vld [vmem:[#allocation2 + $0x278] sm:$0xf]
    %v722 = vld [vmem:[#allocation2 + $0x280] sm:$0xf]
    %v723 = vld [vmem:[#allocation2 + $0x288] sm:$0xf]
    %v724 = vld [vmem:[#allocation2 + $0x290] sm:$0xf]
    %v725 = vld [vmem:[#allocation2 + $0x298] sm:$0xf]
    %v726 = vld [vmem:[#allocation2 + $0x2a0] sm:$0xf]
    %v727 = vld [vmem:[#allocation2 + $0x2a8] sm:$0xf]
    %v728 = vld [vmem:[#allocation2 + $0x2b0] sm:$0xf]
    %v729 = vld [vmem:[#allocation2 + $0x2b8] sm:$0xf]
    %v730 = vld [vmem:[#allocation2 + $0x2c0] sm:$0xf]
    %v731 = vld [vmem:[#allocation2 + $0x2c8] sm:$0xf]
    %v732 = vpack.c.bf16 %v715, %v715
    %v733 = vld [vmem:[%s3 + $0x5] ss:$0 sm:$0xff]
    %v750 = vunpack.c.l.b16 %v716
    %v751 = vunpack.c.l.b16 %v717
    %v752 = vunpack.c.l.b16 %v718
    %v753 = vunpack.c.l.b16 %v719
    %v754 = vunpack.c.l.b16 %v720
    %v755 = vunpack.c.l.b16 %v721
    %v756 = vunpack.c.l.b16 %v722
    %v757 = vunpack.c.l.b16 %v723
    %v758 = vunpack.c.l.b16 %v724
    %v759 = vunpack.c.l.b16 %v725
    %v760 = vunpack.c.l.b16 %v726
    %v761 = vunpack.c.l.b16 %v727
    %v762 = vunpack.c.l.b16 %v728
    %v763 = vunpack.c.l.b16 %v729
    %v764 = vunpack.c.l.b16 %v730
    %v765 = vunpack.c.l.b16 %v731
    %v766 = vpack.c.b16 %v751, %v750
    %v767 = vpack.c.b16 %v753, %v752
    %v768 = vpack.c.b16 %v755, %v754
    %v769 = vpack.c.b16 %v757, %v756
    %v770 = vpack.c.b16 %v759, %v758
    %v771 = vpack.c.b16 %v761, %v760
    %v772 = vpack.c.b16 %v763, %v762
    %v773 = vpack.c.b16 %v765, %v764
    %782 = vmatprep.subr.bf16.mxu0 0
    %783 = vmatpush1.bf16.msra.mxu0 %v773
    %784 = vmatprep.subr.bf16.mxu0 0
    %785 = vmatpush1.bf16.msra.mxu0 %v772
    %786 = vmatprep.subr.bf16.mxu0 0
    %787 = vmatpush1.bf16.msra.mxu0 %v771
    %788 = vmatprep.subr.bf16.mxu0 0
    %789 = vmatpush1.bf16.msra.mxu0 %v770
    %790 = vmatprep.subr.bf16.mxu0 0
    %791 = vmatpush1.bf16.msra.mxu0 %v769
    %792 = vmatprep.subr.bf16.mxu0 0
    %793 = vmatpush1.bf16.msra.mxu0 %v768
    %794 = vmatprep.subr.bf16.mxu0 0
    %795 = vmatpush1.bf16.msra.mxu0 %v767
    %796 = vmatprep.subr.bf16.mxu0 0
    %797 = vmatpush1.bf16.msra.mxu0 %v766
    %798 = vmatprep.subr.bf16.mxu0 0
    %799 = vmatpush2.bf16.msra.mxu0 0
    %800 = vmatprep.subr.bf16.mxu0 0
    %801 = vmatpush2.bf16.msra.mxu0 0
    %802 = vmatprep.subr.bf16.mxu0 0
    %803 = vmatpush2.bf16.msra.mxu0 0
    %804 = vmatprep.subr.bf16.mxu0 0
    %805 = vmatpush2.bf16.msra.mxu0 0
    %806 = vmatprep.subr.bf16.mxu0 0
    %807 = vmatpush2.bf16.msra.mxu0 0
    %808 = vmatprep.subr.bf16.mxu0 0
    %809 = vmatpush2.bf16.msra.mxu0 0
    %810 = vmatprep.subr.bf16.mxu0 0
    %811 = vmatpush2.bf16.msra.mxu0 0
    %812 = vmatprep.subr.bf16.mxu0 0
    %813 = vmatpush2.bf16.msra.mxu0 0
    %814 = vmatprep.mubr.bf16.mxu0 0
    %815 = vmatmul.mubr.bf16.gmra.mxu0 %v732
    %v816 = vpop.f32.mrf.mxu0
    %v817 = vadd.f32 %v733, %v816
    %v818 = vpop.f32.mrf.mxu0
    %v819 = vpop.f32.mrf.mxu0
    %v820 = vpop.f32.mrf.mxu0
    %821 = vdwg.mxu0
    %v822 = vtanh.pop %v817
    %v823 = vld [vmem:[#allocation2 + $0x2d0] sm:$0xf]
    %v824 = vld [vmem:[#allocation2 + $0x2d8] sm:$0xf]
    %v825 = vld [vmem:[#allocation2 + $0x2e0] sm:$0xf]
    %v826 = vld [vmem:[#allocation2 + $0x2e8] sm:$0xf]
    %v827 = vld [vmem:[#allocation2 + $0x2f0] sm:$0xf]
    %v828 = vld [vmem:[#allocation2 + $0x2f8] sm:$0xf]
    %v829 = vld [vmem:[#allocation2 + $0x300] sm:$0xf]
    %v830 = vld [vmem:[#allocation2 + $0x308] sm:$0xf]
    %v831 = vld [vmem:[#allocation2 + $0x310] sm:$0xf]
    %v832 = vld [vmem:[#allocation2 + $0x318] sm:$0xf]
    %v833 = vld [vmem:[#allocation2 + $0x320] sm:$0xf]
    %v834 = vld [vmem:[#allocation2 + $0x328] sm:$0xf]
    %v835 = vld [vmem:[#allocation2 + $0x330] sm:$0xf]
    %v836 = vld [vmem:[#allocation2 + $0x338] sm:$0xf]
    %v837 = vld [vmem:[#allocation2 + $0x340] sm:$0xf]
    %v838 = vld [vmem:[#allocation2 + $0x348] sm:$0xf]
    %v839 = vpack.c.bf16 %v822, %v822
    %v840 = vld [vmem:[%s3 + $0x6] ss:$0 sm:$0xff]
    %v857 = vunpack.c.l.b16 %v823
    %v858 = vunpack.c.l.b16 %v824
    %v859 = vunpack.c.l.b16 %v825
    %v860 = vunpack.c.l.b16 %v826
    %v861 = vunpack.c.l.b16 %v827
    %v862 = vunpack.c.l.b16 %v828
    %v863 = vunpack.c.l.b16 %v829
    %v864 = vunpack.c.l.b16 %v830
    %v865 = vunpack.c.l.b16 %v831
    %v866 = vunpack.c.l.b16 %v832
    %v867 = vunpack.c.l.b16 %v833
    %v868 = vunpack.c.l.b16 %v834
    %v869 = vunpack.c.l.b16 %v835
    %v870 = vunpack.c.l.b16 %v836
    %v871 = vunpack.c.l.b16 %v837
    %v872 = vunpack.c.l.b16 %v838
    %v873 = vpack.c.b16 %v858, %v857
    %v874 = vpack.c.b16 %v860, %v859
    %v875 = vpack.c.b16 %v862, %v861
    %v876 = vpack.c.b16 %v864, %v863
    %v877 = vpack.c.b16 %v866, %v865
    %v878 = vpack.c.b16 %v868, %v867
    %v879 = vpack.c.b16 %v870, %v869
    %v880 = vpack.c.b16 %v872, %v871
    %889 = vmatprep.subr.bf16.mxu0 0
    %890 = vmatpush1.bf16.msra.mxu0 %v880
    %891 = vmatprep.subr.bf16.mxu0 0
    %892 = vmatpush1.bf16.msra.mxu0 %v879
    %893 = vmatprep.subr.bf16.mxu0 0
    %894 = vmatpush1.bf16.msra.mxu0 %v878
    %895 = vmatprep.subr.bf16.mxu0 0
    %896 = vmatpush1.bf16.msra.mxu0 %v877
    %897 = vmatprep.subr.bf16.mxu0 0
    %898 = vmatpush1.bf16.msra.mxu0 %v876
    %899 = vmatprep.subr.bf16.mxu0 0
    %900 = vmatpush1.bf16.msra.mxu0 %v875
    %901 = vmatprep.subr.bf16.mxu0 0
    %902 = vmatpush1.bf16.msra.mxu0 %v874
    %903 = vmatprep.subr.bf16.mxu0 0
    %904 = vmatpush1.bf16.msra.mxu0 %v873
    %905 = vmatprep.subr.bf16.mxu0 0
    %906 = vmatpush2.bf16.msra.mxu0 0
    %907 = vmatprep.subr.bf16.mxu0 0
    %908 = vmatpush2.bf16.msra.mxu0 0
    %909 = vmatprep.subr.bf16.mxu0 0
    %910 = vmatpush2.bf16.msra.mxu0 0
    %911 = vmatprep.subr.bf16.mxu0 0
    %912 = vmatpush2.bf16.msra.mxu0 0
    %913 = vmatprep.subr.bf16.mxu0 0
    %914 = vmatpush2.bf16.msra.mxu0 0
    %915 = vmatprep.subr.bf16.mxu0 0
    %916 = vmatpush2.bf16.msra.mxu0 0
    %917 = vmatprep.subr.bf16.mxu0 0
    %918 = vmatpush2.bf16.msra.mxu0 0
    %919 = vmatprep.subr.bf16.mxu0 0
    %920 = vmatpush2.bf16.msra.mxu0 0
    %921 = vmatprep.mubr.bf16.mxu0 0
    %922 = vmatmul.mubr.bf16.gmra.mxu0 %v839
    %v923 = vpop.f32.mrf.mxu0
    %v924 = vadd.f32 %v840, %v923
    %v925 = vpop.f32.mrf.mxu0
    %v926 = vpop.f32.mrf.mxu0
    %v927 = vpop.f32.mrf.mxu0
    %928 = vdwg.mxu0
    %vm929 = vcmask 23552
    %v930 = vsel %vm929, %v924, -inf
    %931 = vmax.xlane.f32.xlu0 %v930
    %v932 = vpop.xlane.xlu0 %931
    %v933 = vsub.f32 %v924, %v932
    %v934 = vmul.f32 %v933, 1.442695
    %v935 = vpow.pop %v934
    %v936 = vsel %vm929, %v935, 0.0
    %937 = vadd.xlane.f32.xlu0 %v936
    %v938 = vpop.xlane.xlu0 %937
    %v939 = vlog2.pop %v938
    %v940 = vmul.f32 %v939, 0.6931472
    %v941 = vadd.f32 %v932, %v940
    %v942 = vlaneseq
    %v943 = vand.u32 %v942, 127
    %vm944 = vcmp.lt.s32.totalorder %v943, 3
    %v945 = vsub.f32 %v924, %v941
    %v946 = vsel %vm944, %v945, %v924
    %947 = vst [vmem:[%s5] sm:$0xff] %v946
    // Predicated region
    $region22: #{modded_rl_starter_forward.1} parent=1 // pred_check
      _
    $region23: #{modded_rl_starter_forward.1} parent=1 // pred_check_branch
      %949 = sbr.rel (0) target = $region25
    $region24: #{modded_rl_starter_forward.1} parent=1 // pred_region
      _
    $region25: #{modded_rl_starter_forward.1} parent=1 // pred_fallthru
      _
    // Predicated region
    $region26: #{modded_rl_starter_forward.1} parent=1 // pred_check
      _
    $region27: #{modded_rl_starter_forward.1} parent=1 // pred_check_branch
      %951 = sbr.rel (0) target = $region29
    $region28: #{modded_rl_starter_forward.1} parent=1 // pred_region
      _
    $region29: #{modded_rl_starter_forward.1} parent=1 // pred_fallthru
      _
    // Predicated region
    $region30: #{modded_rl_starter_forward.1} parent=1 // pred_check
      _
    $region31: #{modded_rl_starter_forward.1} parent=1 // pred_check_branch
      %953 = sbr.rel (0) target = $region33
    $region32: #{modded_rl_starter_forward.1} parent=1 // pred_region
      _
    $region33: #{modded_rl_starter_forward.1} parent=1 // pred_fallthru
      _
    // Predicated region
    $region34: #{modded_rl_starter_forward.1} parent=1 // pred_check
      _
    $region35: #{modded_rl_starter_forward.1} parent=1 // pred_check_branch
      %955 = sbr.rel (0) target = $region37
    $region36: #{modded_rl_starter_forward.1} parent=1 // pred_region
      _
    $region37: #{modded_rl_starter_forward.1} parent=1 // pred_fallthru
      _
    %956 = vsyncpa [#allocation3], 1

</llo_original>
